<compile_context>
chip_gen: v7x
topology: tpu7x:2x2x1
jax: 0.10.0
libtpu: 0.0.40
codegen_flags: <defaults>
</compile_context>

<pallas_src>
import functools
import numpy as np
import jax
import jax.numpy as jnp
from jax import lax
from jax.experimental import pallas as pl
from jax.experimental.pallas import tpu as pltpu

# ---- "configer" values (deterministic, in-script) ----------------------------
TEMPERATURE = 0.1
BASE_TEMPERATURE = 0.07
IGNORE_LABEL = -1
MAX_SAMPLES = 128
MAX_VIEWS = 32  # present in module __init__, unused in this code path


# ---- Pallas kernel: the _contrastive() hot path ------------------------------
def _contrastive_kernel(fa_ref, fc_ref, lab_col_ref, lab_row_ref, pos_ref,
                        out_ref, *, temperature, base_temperature):
    # Anchor rows for this grid step; fold 1/temperature into the small (TM, D)
    # operand and feed the MXU bf16 inputs with an f32 accumulator.
    a = (fa_ref[...] * (1.0 / temperature)).astype(jnp.bfloat16)     # (TM, D)
    c = fc_ref[...].astype(jnp.bfloat16)                             # (N, D)

    # anchor_dot_contrast = (A @ C^T) / T, without materializing a transposed copy.
    adc = lax.dot_general(a, c, (((1,), (1,)), ((), ())),
                          preferred_element_type=jnp.float32)        # (TM, N)
    logits = adc - jnp.max(adc, axis=1, keepdims=True)

    tm, n = logits.shape
    lab_col = lab_col_ref[...]                                       # (TM, 1)
    lab_row = lab_row_ref[...]                                       # (1, N) lane-dense
    same = lab_col == lab_row                                        # (TM, N) bool
    row0 = pl.program_id(0) * tm
    not_diag = (lax.broadcasted_iota(jnp.int32, (tm, n), 0) + row0) != \
               lax.broadcasted_iota(jnp.int32, (tm, n), 1)

    exp_logits = jnp.exp(logits)
    neg_sum = jnp.sum(jnp.where(same, 0.0, exp_logits), axis=1, keepdims=True)
    log_prob = logits - jnp.log(exp_logits + neg_sum)

    pos_sum = jnp.sum(jnp.where(same & not_diag, log_prob, 0.0),
                      axis=1, keepdims=True)
    # positives-per-row = (#same-label rows - 1), precomputed host-side; avoids a
    # second (TM, N) cross-lane reduction through the XLU.
    mean_log_prob_pos = pos_sum / pos_ref[...]
    out_ref[...] = -(temperature / base_temperature) * mean_log_prob_pos


def _pick_row_tile(n):
    # >=2 "parallel" grid steps lets v7x's two TensorCores split the rows;
    # harmless (one extra ~0.35us step) on single-TC v5e/v6e.
    if n >= 512:
        for tm in (256, 128):
            if n % tm == 0:
                return tm
    if n % 2 == 0 and (n // 2) % 8 == 0:
        return n // 2
    return n


def contrastive_loss_pallas(contrast_feature, lab_col, lab_row, pos_cnt):
    """contrast_feature (N,D) f32; lab_col (N,1); lab_row (1,N); pos_cnt (N,1) -> scalar."""
    N, D = contrast_feature.shape
    tm = _pick_row_tile(N)
    grid = (N // tm,)
    kernel = functools.partial(_contrastive_kernel,
                               temperature=TEMPERATURE,
                               base_temperature=BASE_TEMPERATURE)
    # TODO(synk): for production sizes (N in the thousands) stream column blocks
    # (online-softmax two-pass) instead of holding full (TM, N) temporaries in VMEM.
    per_row = pl.pallas_call(
        kernel,
        out_shape=jax.ShapeDtypeStruct((N, 1), jnp.float32),
        grid=grid,
        in_specs=[
            pl.BlockSpec((tm, D), lambda i: (i, 0)),   # anchor row block
            pl.BlockSpec((N, D), lambda i: (0, 0)),    # full contrast matrix (resident)
            pl.BlockSpec((tm, 1), lambda i: (i, 0)),   # labels, column orientation
            pl.BlockSpec((1, N), lambda i: (0, 0)),    # labels, row orientation
            pl.BlockSpec((tm, 1), lambda i: (i, 0)),   # positives per row
        ],
        out_specs=pl.BlockSpec((tm, 1), lambda i: (i, 0)),
        compiler_params=pltpu.CompilerParams(dimension_semantics=("parallel",)),
    )(contrast_feature, contrast_feature, lab_col, lab_row, pos_cnt)
    # loss.mean() of the reference.
    return jnp.mean(per_row)


# ---- hard-anchor sampling (data-dependent shapes -> host-side glue) ----------
def _hard_anchor_sampling(X, gt, max_samples, ignore_label):
    # X: (B, HW, D) float32, gt: (B, HW) int64
    batch_size, _, feat_dim = X.shape
    classes = []
    total_classes = 0
    for ii in range(batch_size):
        this_classes = np.unique(gt[ii])
        classes.append([int(c) for c in this_classes if c != ignore_label])
        total_classes += len(this_classes)  # unfiltered count, matches reference quirk
    if total_classes == 0:
        return None, None
    n_view = max_samples // total_classes
    easy_view = n_view // 2
    hard_view = n_view - easy_view

    X_ = np.zeros((total_classes, n_view, feat_dim), dtype=np.float32)
    y_ = np.zeros((total_classes,), dtype=np.float32)
    ptr = 0
    for ii in range(batch_size):
        this_gt = gt[ii]
        for cls_id in classes[ii]:
            hard_indices = np.nonzero(this_gt != cls_id)[0]
            easy_indices = np.nonzero(this_gt == cls_id)[0]
            num_hard, num_easy = hard_indices.shape[0], easy_indices.shape[0]
            # TODO(synk): the reference uses torch.randperm plus a global stateful
            # pos_list/neg_list memory bank; selection here is deterministic
            # (first-k), which preserves shapes/semantics otherwise.
            if num_hard > 0:
                if 0 < num_hard < hard_view:
                    hard_indices = np.tile(hard_indices, hard_view // num_hard)
                else:
                    hard_indices = hard_indices[:hard_view]
            if num_easy > 0:
                if 0 < num_easy < easy_view:
                    easy_indices = np.tile(easy_indices, easy_view // num_easy)
                else:
                    easy_indices = easy_indices[:easy_view]
            indices = np.concatenate([hard_indices, easy_indices], axis=0)
            X_[ptr, : indices.shape[0], :] = X[ii, indices, :]
            y_[ptr] = cls_id
            ptr += 1
    return X_, y_


# ---- forward() ---------------------------------------------------------------
def pixel_contrast_loss_forward(features, labels, predict):
    # features: (B, C, H, W) float32 (NCHW); labels: (B, Hl, Wl) int; predict: (B, H, W) int
    B, C, H, W = features.shape

    labels_np = np.asarray(labels)
    Hl, Wl = labels_np.shape[1], labels_np.shape[2]
    # F.interpolate(mode='nearest'): src = floor(dst * in/out)
    hi = np.floor(np.arange(H) * (Hl / H)).astype(np.int64)
    wi = np.floor(np.arange(W) * (Wl / W)).astype(np.int64)
    labels_rs = labels_np[:, hi[:, None], wi[None, :]].astype(np.int64)
    assert labels_rs.shape[-1] == features.shape[-1]
    labels_flat = labels_rs.reshape(B, -1)
    _ = np.asarray(predict).reshape(B, -1)  # reshaped but unused downstream (as in reference)

    # TODO(synk): sampling stays host-side (torch.unique / randperm / memory bank
    # -> data-dependent shapes); an on-device scalar-prefetch gather would remove
    # this device<->host round trip, which dominates end-to-end wall clock.
    feats_np = np.asarray(features).transpose(0, 2, 3, 1).reshape(B, -1, C)
    X_, y_ = _hard_anchor_sampling(feats_np, labels_flat, MAX_SAMPLES, IGNORE_LABEL)
    if X_ is None:
        return jnp.float32(0.0)

    anchor_num, n_view, D = X_.shape
    # contrast_feature = torch.cat(torch.unbind(X_, dim=1), dim=0) -> (n_view*anchor, D)
    contrast_feature = X_.transpose(1, 0, 2).reshape(n_view * anchor_num, D)
    # label of row i is y_[i % anchor_num]  (== mask.repeat(V, V) tiling)
    row_labels = np.tile(y_, n_view).astype(np.float32)
    # positives per row = (#rows with the same label) - 1 (diagonal excluded).
    pos_cnt = (row_labels[:, None] == row_labels[None, :]).sum(1).astype(np.float32) - 1.0
    # TODO(synk): pos_cnt == 0 (a class sampled once with n_view == 1) yields NaN in
    # the reference too; left unguarded to preserve semantics.

    return contrastive_loss_pallas(
        jnp.asarray(contrast_feature, dtype=jnp.float32),
        jnp.asarray(row_labels.reshape(-1, 1)),
        jnp.asarray(row_labels.reshape(1, -1)),
        jnp.asarray(pos_cnt.reshape(-1, 1)),
    )


if __name__ == "__main__":
    key = jax.random.PRNGKey(0)
    kf, kl, kp = jax.random.split(key, 3)

    B, C, H, W = 2, 32, 16, 16
    # The reference pipeline feeds L2-normalized projection-head embeddings into this
    # loss; unnormalized random features make exp(logits) underflow to exactly 0 and
    # the reference loss itself is -inf, so normalize the synthetic features.
    features = jax.random.normal(kf, (B, C, H, W), dtype=jnp.float32)
    features = features / jnp.linalg.norm(features, axis=1, keepdims=True)
    labels = jax.random.randint(kl, (B, 32, 32), 0, 4, dtype=jnp.int32)   # coarse GT map
    predict = jax.random.randint(kp, (B, H, W), 0, 4, dtype=jnp.int32)

    loss = pixel_contrast_loss_forward(features, labels, predict)
    loss = jax.block_until_ready(loss)
    assert np.isfinite(np.asarray(loss)).all()
    print("KERNEL_OK")
</pallas_src>

<mosaic_0001>
module attributes {stable_mosaic.version = 11 : i64} {
  func.func @_contrastive_kernel(%arg0: i32, %arg1: memref<64x32xf32, #tpu.memory_space<vmem>>, %arg2: memref<128x32xf32, #tpu.memory_space<vmem>>, %arg3: memref<64x1xf32, #tpu.memory_space<vmem>>, %arg4: memref<1x128xf32, #tpu.memory_space<vmem>>, %arg5: memref<64x1xf32, #tpu.memory_space<vmem>>, %arg6: memref<64x1xf32, #tpu.memory_space<vmem>>) attributes {dimension_semantics = [#tpu.dimension_semantics<parallel>], iteration_bounds = array<i64: 2>, scalar_prefetch = 0 : i64, scratch_operands = 0 : i64, tpu.core_type = #tpu.core_type<tc>, window_params = [{transform_indices = @transform_0, window_bounds = array<i64: 64, 32>}, {pipeline_mode = #tpu.pipeline_mode<synchronous>, transform_indices = @transform_1, window_bounds = array<i64: 128, 32>}, {transform_indices = @transform_2, window_bounds = array<i64: 64, 1>}, {pipeline_mode = #tpu.pipeline_mode<synchronous>, transform_indices = @transform_3, window_bounds = array<i64: 1, 128>}, {transform_indices = @transform_4, window_bounds = array<i64: 64, 1>}, {transform_indices = @transform_5, window_bounds = array<i64: 64, 1>}]} {
    %c0 = arith.constant 0 : index
    %c0_0 = arith.constant 0 : index
    %0 = vector.load %arg1[%c0, %c0_0] : memref<64x32xf32, #tpu.memory_space<vmem>>, vector<64x32xf32>
    %cst = arith.constant 1.000000e+01 : f32
    %1 = vector.broadcast %cst : f32 to vector<64x32xf32>
    %2 = arith.mulf %0, %1 : vector<64x32xf32>
    %3 = arith.truncf %2 : vector<64x32xf32> to vector<64x32xbf16>
    %c0_1 = arith.constant 0 : index
    %c0_2 = arith.constant 0 : index
    %4 = vector.load %arg2[%c0_1, %c0_2] : memref<128x32xf32, #tpu.memory_space<vmem>>, vector<128x32xf32>
    %5 = arith.truncf %4 : vector<128x32xf32> to vector<128x32xbf16>
    %cst_3 = arith.constant dense<0.000000e+00> : vector<64x128xf32>
    %6 = tpu.matmul %3, %5, %cst_3 {dimension_numbers = #tpu.dot_dimension_numbers<[1], [1], [0], [0], [0, 0, 1, 0], [], []>} : vector<64x32xbf16>, vector<128x32xbf16>, vector<64x128xf32> -> vector<64x128xf32>
    %cst_4 = arith.constant dense<0xFF800000> : vector<64xf32>
    %7 = vector.multi_reduction <maximumf>, %6, %cst_4 [1] : vector<64x128xf32> to vector<64xf32>
    %8 = vector.shape_cast %7 : vector<64xf32> to vector<64x1xf32>
    %9 = vector.broadcast %8 : vector<64x1xf32> to vector<64x128xf32>
    %10 = arith.subf %6, %9 : vector<64x128xf32>
    %c0_5 = arith.constant 0 : index
    %c0_6 = arith.constant 0 : index
    %11 = vector.load %arg3[%c0_5, %c0_6] : memref<64x1xf32, #tpu.memory_space<vmem>>, vector<64x1xf32>
    %c0_7 = arith.constant 0 : index
    %c0_8 = arith.constant 0 : index
    %12 = vector.load %arg4[%c0_7, %c0_8] : memref<1x128xf32, #tpu.memory_space<vmem>>, vector<1x128xf32>
    %13 = vector.broadcast %11 : vector<64x1xf32> to vector<64x128xf32>
    %14 = vector.broadcast %12 : vector<1x128xf32> to vector<64x128xf32>
    %15 = arith.cmpf oeq, %13, %14 : vector<64x128xf32>
    %c64_i32 = arith.constant 64 : i32
    %16 = arith.muli %arg0, %c64_i32 : i32
    %17 = tpu.iota {dimensions = array<i32: 0>} : vector<64x128xi32>
    %18 = vector.broadcast %16 : i32 to vector<64x128xi32>
    %19 = arith.addi %17, %18 : vector<64x128xi32>
    %20 = tpu.iota {dimensions = array<i32: 1>} : vector<64x128xi32>
    %21 = arith.cmpi ne, %19, %20 : vector<64x128xi32>
    %22 = math.exp %10 : vector<64x128xf32>
    %cst_9 = arith.constant 0.000000e+00 : f32
    %23 = vector.broadcast %cst_9 : f32 to vector<64x128xf32>
    %24 = arith.select %15, %23, %22 : vector<64x128xi1>, vector<64x128xf32>
    %cst_10 = arith.constant dense<0.000000e+00> : vector<64xf32>
    %25 = vector.multi_reduction <add>, %24, %cst_10 [1] : vector<64x128xf32> to vector<64xf32>
    %26 = vector.shape_cast %25 : vector<64xf32> to vector<64x1xf32>
    %27 = vector.broadcast %26 : vector<64x1xf32> to vector<64x128xf32>
    %28 = arith.addf %22, %27 : vector<64x128xf32>
    %29 = math.log %28 : vector<64x128xf32>
    %30 = arith.subf %10, %29 : vector<64x128xf32>
    %31 = arith.andi %15, %21 : vector<64x128xi1>
    %cst_11 = arith.constant 0.000000e+00 : f32
    %32 = vector.broadcast %cst_11 : f32 to vector<64x128xf32>
    %33 = arith.select %31, %30, %32 : vector<64x128xi1>, vector<64x128xf32>
    %cst_12 = arith.constant dense<0.000000e+00> : vector<64xf32>
    %34 = vector.multi_reduction <add>, %33, %cst_12 [1] : vector<64x128xf32> to vector<64xf32>
    %35 = vector.shape_cast %34 : vector<64xf32> to vector<64x1xf32>
    %c0_13 = arith.constant 0 : index
    %c0_14 = arith.constant 0 : index
    %36 = vector.load %arg5[%c0_13, %c0_14] : memref<64x1xf32, #tpu.memory_space<vmem>>, vector<64x1xf32>
    %37 = arith.divf %35, %36 : vector<64x1xf32>
    %cst_15 = arith.constant -1.42857146 : f32
    %38 = vector.broadcast %cst_15 : f32 to vector<64x1xf32>
    %39 = arith.mulf %38, %37 : vector<64x1xf32>
    %c0_16 = arith.constant 0 : index
    %c0_17 = arith.constant 0 : index
    %40 = vector.load %arg6[%c0_16, %c0_17] : memref<64x1xf32, #tpu.memory_space<vmem>>, vector<64x1xf32>
    tpu.vector_store %arg6[%c0_16, %c0_17], %39 {strides = array<i32>} : memref<64x1xf32, #tpu.memory_space<vmem>>, vector<64x1xf32>,
    return
  }
  func.func @transform_0(%arg0: i32) -> (i32, i32) {
    %c0_i32 = arith.constant 0 : i32
    %c0_i32_0 = arith.constant 0 : i32
    return %arg0, %c0_i32 : i32, i32
  }
  func.func @transform_1(%arg0: i32) -> (i32, i32) {
    %c0_i32 = arith.constant 0 : i32
    %c0_i32_0 = arith.constant 0 : i32
    %c0_i32_1 = arith.constant 0 : i32
    return %c0_i32, %c0_i32_0 : i32, i32
  }
  func.func @transform_2(%arg0: i32) -> (i32, i32) {
    %c0_i32 = arith.constant 0 : i32
    %c0_i32_0 = arith.constant 0 : i32
    return %arg0, %c0_i32 : i32, i32
  }
  func.func @transform_3(%arg0: i32) -> (i32, i32) {
    %c0_i32 = arith.constant 0 : i32
    %c0_i32_0 = arith.constant 0 : i32
    %c0_i32_1 = arith.constant 0 : i32
    return %c0_i32, %c0_i32_0 : i32, i32
  }
  func.func @transform_4(%arg0: i32) -> (i32, i32) {
    %c0_i32 = arith.constant 0 : i32
    %c0_i32_0 = arith.constant 0 : i32
    return %arg0, %c0_i32 : i32, i32
  }
  func.func @transform_5(%arg0: i32) -> (i32, i32) {
    %c0_i32 = arith.constant 0 : i32
    %c0_i32_0 = arith.constant 0 : i32
    return %arg0, %c0_i32 : i32, i32
  }
}

</mosaic_0001>

<llo_original>
// kernel: tpu_custom_call.1
$region0: #{tpu_custom_call.1}
  #allocation0 [shape = 'u32[]', space=smem, size = 0x4, offset = 0x4, fixed_abs, tag = 'smem constant byte address 0x4 - core index']
  #allocation1 [shape = 'u32[144,128]{1,0:T(1,128)}', space=vmem, size = 0x12000, scoped, tag = 'internal scratch']
  %s0 = inlined_call_operand.vmem [shape: f32[128,32], index: 0, kind: input, shape index: {}]
  %s1 = inlined_call_operand.vmem [shape: f32[128,32], index: 1, kind: input, shape index: {}]
  %s2 = inlined_call_operand.vmem [shape: f32[128,1], index: 2, kind: input, shape index: {}]
  %s3 = inlined_call_operand.vmem [shape: f32[1,128], index: 3, kind: input, shape index: {}]
  %s4 = inlined_call_operand.vmem [shape: f32[128,1], index: 4, kind: input, shape index: {}]
  %s5 = inlined_call_operand.vmem [shape: f32[128,1], index: 5, kind: output, shape index: {}]
  %s6 = sld [smem:[#allocation0]]
  $region53: #{tpu_custom_call.1} parent=0
    _
  %s8 = ssub.s32 1, %s6
  %s9 = scalar_select 0, %s8, %s6
  loop: start=0, step=1, limit=4
  $region2: #{tpu_custom_call.1} parent=0 // loop_pre_header
    _
  $region3: #{tpu_custom_call.1} parent=0 // loop_header
    %s11 = sphi 0, %s15
    %p12 = scmp.ge.s32.totalorder %s11, 4
    %s21 = sphi 0, %s23
    %s24 = sphi 0, %s21
    %s25 = sphi 0, %s24
    %s41 = sphi 0, %s25
    %s45 = sphi 0, %s45
    %s47 = sphi 0, %s45
    %s48 = sphi 0, %s47
    %s62 = sphi 0, %s48
    %s68 = sphi 0, %s70
    %s71 = sphi 0, %s68
    %s72 = sphi 0, %s71
    %s88 = sphi 0, %s72
    %s92 = sphi 0, %s92
    %s94 = sphi 0, %s92
    %s95 = sphi 0, %s94
    %s109 = sphi 0, %s95
    %s115 = sphi 0, %s117
    %s118 = sphi 0, %s115
    %s119 = sphi 0, %s118
    %s135 = sphi 0, %s119
    %s141 = sphi 0, %s143
    %s144 = sphi 0, %s141
    %s145 = sphi 0, %s144
    %s161 = sphi 0, %s145
  $region4: #{tpu_custom_call.1} parent=0 // loop_header_branch
    %14 = sbr.rel (%p12) target = $region8
  $region5: #{tpu_custom_call.1} parent=0 // loop_body
    %s16 = ssub.s32 %s11, 1
    %s17 = ssub.s32 %s11, 2
    %s18 = sadd.s32 %s11, 1
    %s19 = ssub.s32 %s11, %s18
    %p20 = scmp.eq.s32.totalorder %s19, 0
    %s22 = sadd.s32 %s21, 1
    %s23 = scalar_select %p20, %s21, %s22
    %p26 = pneg %p20
    %p27 = scmp.eq.s32.totalorder %s11, 1
    %p28 = por %p26, %p27
    %p29 = scmp.ne.s32.totalorder %s21, %s24
    %p30 = scmp.eq.s32.totalorder %s11, 0
    %p31 = por %p29, %p30
    %p32 = scmp.ne.s32.totalorder %s21, %s24
    %p33 = scmp.eq.s32.totalorder %s16, 1
    %p34 = por %p32, %p33
    %p35 = scmp.ne.s32.totalorder %s24, %s25
    %p36 = scmp.eq.s32.totalorder %s16, 0
    %p37 = por %p35, %p36
    %p38 = scmp.ne.s32.totalorder %s24, %s25
    %p39 = scmp.eq.s32.totalorder %s17, 1
    %p40 = por %p38, %p39
    %p42 = scmp.ne.s32.totalorder %s25, %s41
    %p43 = scmp.eq.s32.totalorder %s17, 0
    %p44 = por %p42, %p43
    %s46 = sadd.s32 %s45, 1
    %p49 = scmp.eq.s32.totalorder %s11, 1
    %p50 = scmp.ne.s32.totalorder %s45, %s47
    %p51 = scmp.eq.s32.totalorder %s11, 0
    %p52 = por %p50, %p51
    %p53 = scmp.ne.s32.totalorder %s45, %s47
    %p54 = scmp.eq.s32.totalorder %s16, 1
    %p55 = por %p53, %p54
    %p56 = scmp.ne.s32.totalorder %s47, %s48
    %p57 = scmp.eq.s32.totalorder %s16, 0
    %p58 = por %p56, %p57
    %p59 = scmp.ne.s32.totalorder %s47, %s48
    %p60 = scmp.eq.s32.totalorder %s17, 1
    %p61 = por %p59, %p60
    %p63 = scmp.ne.s32.totalorder %s48, %s62
    %p64 = scmp.eq.s32.totalorder %s17, 0
    %p65 = por %p63, %p64
    %s66 = ssub.s32 %s11, %s18
    %p67 = scmp.eq.s32.totalorder %s66, 0
    %s69 = sadd.s32 %s68, 1
    %s70 = scalar_select %p67, %s68, %s69
    %p73 = pneg %p67
    %p74 = scmp.eq.s32.totalorder %s11, 1
    %p75 = por %p73, %p74
    %p76 = scmp.ne.s32.totalorder %s68, %s71
    %p77 = scmp.eq.s32.totalorder %s11, 0
    %p78 = por %p76, %p77
    %p79 = scmp.ne.s32.totalorder %s68, %s71
    %p80 = scmp.eq.s32.totalorder %s16, 1
    %p81 = por %p79, %p80
    %p82 = scmp.ne.s32.totalorder %s71, %s72
    %p83 = scmp.eq.s32.totalorder %s16, 0
    %p84 = por %p82, %p83
    %p85 = scmp.ne.s32.totalorder %s71, %s72
    %p86 = scmp.eq.s32.totalorder %s17, 1
    %p87 = por %p85, %p86
    %p89 = scmp.ne.s32.totalorder %s72, %s88
    %p90 = scmp.eq.s32.totalorder %s17, 0
    %p91 = por %p89, %p90
    %s93 = sadd.s32 %s92, 1
    %p96 = scmp.eq.s32.totalorder %s11, 1
    %p97 = scmp.ne.s32.totalorder %s92, %s94
    %p98 = scmp.eq.s32.totalorder %s11, 0
    %p99 = por %p97, %p98
    %p100 = scmp.ne.s32.totalorder %s92, %s94
    %p101 = scmp.eq.s32.totalorder %s16, 1
    %p102 = por %p100, %p101
    %p103 = scmp.ne.s32.totalorder %s94, %s95
    %p104 = scmp.eq.s32.totalorder %s16, 0
    %p105 = por %p103, %p104
    %p106 = scmp.ne.s32.totalorder %s94, %s95
    %p107 = scmp.eq.s32.totalorder %s17, 1
    %p108 = por %p106, %p107
    %p110 = scmp.ne.s32.totalorder %s95, %s109
    %p111 = scmp.eq.s32.totalorder %s17, 0
    %p112 = por %p110, %p111
    %s113 = ssub.s32 %s11, %s18
    %p114 = scmp.eq.s32.totalorder %s113, 0
    %s116 = sadd.s32 %s115, 1
    %s117 = scalar_select %p114, %s115, %s116
    %p120 = pneg %p114
    %p121 = scmp.eq.s32.totalorder %s11, 1
    %p122 = por %p120, %p121
    %p123 = scmp.ne.s32.totalorder %s115, %s118
    %p124 = scmp.eq.s32.totalorder %s11, 0
    %p125 = por %p123, %p124
    %p126 = scmp.ne.s32.totalorder %s115, %s118
    %p127 = scmp.eq.s32.totalorder %s16, 1
    %p128 = por %p126, %p127
    %p129 = scmp.ne.s32.totalorder %s118, %s119
    %p130 = scmp.eq.s32.totalorder %s16, 0
    %p131 = por %p129, %p130
    %p132 = scmp.ne.s32.totalorder %s118, %s119
    %p133 = scmp.eq.s32.totalorder %s17, 1
    %p134 = por %p132, %p133
    %p136 = scmp.ne.s32.totalorder %s119, %s135
    %p137 = scmp.eq.s32.totalorder %s17, 0
    %p138 = por %p136, %p137
    %s139 = ssub.s32 %s11, %s18
    %p140 = scmp.eq.s32.totalorder %s139, 0
    %s142 = sadd.s32 %s141, 1
    %s143 = scalar_select %p140, %s141, %s142
    %p146 = pneg %p140
    %p147 = scmp.eq.s32.totalorder %s11, 1
    %p148 = por %p146, %p147
    %p149 = scmp.ne.s32.totalorder %s141, %s144
    %p150 = scmp.eq.s32.totalorder %s11, 0
    %p151 = por %p149, %p150
    %p152 = scmp.ne.s32.totalorder %s141, %s144
    %p153 = scmp.eq.s32.totalorder %s16, 1
    %p154 = por %p152, %p153
    %p155 = scmp.ne.s32.totalorder %s144, %s145
    %p156 = scmp.eq.s32.totalorder %s16, 0
    %p157 = por %p155, %p156
    %p158 = scmp.ne.s32.totalorder %s144, %s145
    %p159 = scmp.eq.s32.totalorder %s17, 1
    %p160 = por %p158, %p159
    %p162 = scmp.ne.s32.totalorder %s145, %s161
    %p163 = scmp.eq.s32.totalorder %s17, 0
    %p164 = por %p162, %p163
    %p165 = scmp.le.s32.totalorder 1, %s11
    %p166 = scmp.lt.s32.totalorder %s11, 3
    %p167 = pnand %p165, %p166
    %p168 = pneg %p167
    // Predicated region
    $region9: #{tpu_custom_call.1} parent=5 // pred_check
      _
    $region10: #{tpu_custom_call.1} parent=5 // pred_check_branch
      %170 = sbr.rel (%p167) target = $region12
    $region11: #{tpu_custom_call.1} parent=5 // pred_region
      %s171 = ssub.s32 %s11, 1
      // Predicated region
      $region13: #{tpu_custom_call.1} parent=11 // pred_check
        %p172 = pneg %p58
      $region14: #{tpu_custom_call.1} parent=11 // pred_check_branch
        %174 = sbr.rel (%p172) target = $region16
      $region15: #{tpu_custom_call.1} parent=11 // pred_region
        _
      $region16: #{tpu_custom_call.1} parent=11 // pred_fallthru
        _
      // Predicated region
      $region17: #{tpu_custom_call.1} parent=11 // pred_check
        %p175 = pneg %p105
      $region18: #{tpu_custom_call.1} parent=11 // pred_check_branch
        %177 = sbr.rel (%p175) target = $region20
      $region19: #{tpu_custom_call.1} parent=11 // pred_region
        _
      $region20: #{tpu_custom_call.1} parent=11 // pred_fallthru
        _
    $region12: #{tpu_custom_call.1} parent=5 // pred_fallthru
      _
    %p178 = scmp.lt.s32.totalorder %s11, 2
    // Predicated region
    $region21: #{tpu_custom_call.1} parent=5 // pred_check
      %p179 = pneg %p178
    $region22: #{tpu_custom_call.1} parent=5 // pred_check_branch
      %181 = sbr.rel (%p179) target = $region24
    $region23: #{tpu_custom_call.1} parent=5 // pred_region
      // Predicated region
      $region25: #{tpu_custom_call.1} parent=23 // pred_check
        %p182 = pneg %p31
      $region26: #{tpu_custom_call.1} parent=23 // pred_check_branch
        %184 = sbr.rel (%p182) target = $region28
      $region27: #{tpu_custom_call.1} parent=23 // pred_region
        %s185 = smul.u32 8, %s11
        %p186 = scmp.lt.s32.totalorder %s185, 15
        %s187 = scalar_select %p186, %s185, 15
        %s188 = smul.addr %s187, 8
        %s189 = scalar_lea.vmem %s0, %s188
        %s190 = smul.u32 8, %s11
      $region28: #{tpu_custom_call.1} parent=23 // pred_fallthru
        _
      // Predicated region
      $region29: #{tpu_custom_call.1} parent=23 // pred_check
        %p191 = pneg %p78
      $region30: #{tpu_custom_call.1} parent=23 // pred_check_branch
        %193 = sbr.rel (%p191) target = $region32
      $region31: #{tpu_custom_call.1} parent=23 // pred_region
        %s194 = smul.u32 8, %s11
        %p195 = scmp.lt.s32.totalorder %s194, 15
        %s196 = scalar_select %p195, %s194, 15
        %s197 = smul.addr %s196, 8
        %s198 = scalar_lea.vmem %s2, %s197
        %s199 = smul.u32 8, %s11
      $region32: #{tpu_custom_call.1} parent=23 // pred_fallthru
        _
      // Predicated region
      $region33: #{tpu_custom_call.1} parent=23 // pred_check
        %p200 = pneg %p125
      $region34: #{tpu_custom_call.1} parent=23 // pred_check_branch
        %202 = sbr.rel (%p200) target = $region36
      $region35: #{tpu_custom_call.1} parent=23 // pred_region
        %s203 = smul.u32 8, %s11
        %p204 = scmp.lt.s32.totalorder %s203, 15
        %s205 = scalar_select %p204, %s203, 15
        %s206 = smul.addr %s205, 8
        %s207 = scalar_lea.vmem %s4, %s206
        %s208 = smul.u32 8, %s11
      $region36: #{tpu_custom_call.1} parent=23 // pred_fallthru
        _
    $region24: #{tpu_custom_call.1} parent=5 // pred_fallthru
      _
    %p209 = scmp.le.s32.totalorder 1, %s11
    %p210 = scmp.lt.s32.totalorder %s11, 3
    %p211 = pnand %p209, %p210
    %p212 = pneg %p211
    // Predicated region
    $region37: #{tpu_custom_call.1} parent=5 // pred_check
      _
    $region38: #{tpu_custom_call.1} parent=5 // pred_check_branch
      %214 = sbr.rel (%p211) target = $region40
    $region39: #{tpu_custom_call.1} parent=5 // pred_region
      %s215 = ssub.s32 %s11, 1
      %s216 = smul.u32 8, %s16
      %p217 = scmp.lt.s32.totalorder %s216, 15
      %s218 = scalar_select %p217, %s216, 15
      %s219 = smul.addr %s218, 8
      %s220 = scalar_lea.vmem %s0, %s219
      %p221 = pneg %p37
      %p222 = pneg %p34
      %p223 = pneg %p58
      %p224 = pneg %p55
      %s225 = smul.u32 8, %s16
      %p226 = scmp.lt.s32.totalorder %s225, 15
      %s227 = scalar_select %p226, %s225, 15
      %s228 = smul.addr %s227, 8
      %s229 = scalar_lea.vmem %s2, %s228
      %p230 = pneg %p84
      %p231 = pneg %p81
      %p232 = pneg %p105
      %p233 = pneg %p102
      %s234 = smul.u32 8, %s16
      %p235 = scmp.lt.s32.totalorder %s234, 15
      %s236 = scalar_select %p235, %s234, 15
      %s237 = smul.addr %s236, 8
      %s238 = scalar_lea.vmem %s4, %s237
      %p239 = pneg %p131
      %p240 = pneg %p128
      %p241 = pneg %p157
      %p242 = pneg %p154
      %s243 = smul.u32 8, %s16
      %p244 = scmp.lt.s32.totalorder %s243, 15
      %s245 = scalar_select %p244, %s243, 15
      %s246 = smul.addr %s245, 8
      %s247 = scalar_lea.vmem %s5, %s246
      %s248 = smul.u32 8, %s16
      %p249 = scmp.lt.s32.totalorder %s248, 15
      %s250 = scalar_select %p249, %s248, 15
      %s251 = smul.addr %s250, 8
      %s252 = scalar_lea.vmem %s0, %s251
      %s253 = smul.u32 8, %s16
      %s254 = smul.u32 8, %s16
      %p255 = scmp.lt.s32.totalorder %s254, 15
      %s256 = scalar_select %p255, %s254, 15
      %s257 = smul.addr %s256, 8
      %s258 = scalar_lea.vmem %s2, %s257
      %s259 = smul.u32 8, %s16
      %s260 = smul.u32 8, %s16
      %p261 = scmp.lt.s32.totalorder %s260, 15
      %s262 = scalar_select %p261, %s260, 15
      %s263 = smul.addr %s262, 8
      %s264 = scalar_lea.vmem %s4, %s263
      %s265 = smul.u32 8, %s16
      %s266 = smul.u32 8, %s16
      %p267 = scmp.lt.s32.totalorder %s266, 15
      %s268 = scalar_select %p267, %s266, 15
      %s269 = smul.addr %s268, 8
      %s270 = scalar_lea.vmem %s5, %s269
      %s271 = smul.u32 8, %s16
      %v273 = vld [vmem:[%s252] sm:$0xff]
      %v274 = vld [vmem:[%s252 + $0x8] sm:$0xff]
      %v275 = vld [vmem:[%s252 + $0x10] sm:$0xff]
      %v276 = vld [vmem:[%s252 + $0x18] sm:$0xff]
      %v277 = vld [vmem:[%s252 + $0x20] sm:$0xff]
      %v278 = vld [vmem:[%s252 + $0x28] sm:$0xff]
      %v279 = vld [vmem:[%s252 + $0x30] sm:$0xff]
      %v280 = vld [vmem:[%s252 + $0x38] sm:$0xff]
      %v281 = vmul.f32 %v273, 10.0
      %v282 = vmul.f32 %v274, 10.0
      %v283 = vmul.f32 %v275, 10.0
      %v284 = vmul.f32 %v276, 10.0
      %v285 = vmul.f32 %v277, 10.0
      %v286 = vmul.f32 %v278, 10.0
      %v287 = vmul.f32 %v279, 10.0
      %v288 = vmul.f32 %v280, 10.0
      %v289 = vpack.c.bf16 %v282, %v281
      %v290 = vpack.c.bf16 %v284, %v283
      %v291 = vpack.c.bf16 %v286, %v285
      %v292 = vpack.c.bf16 %v288, %v287
      %v293 = vld [vmem:[%s1] sm:$0xff]
      %v294 = vld [vmem:[%s1 + $0x8] sm:$0xff]
      %v295 = vld [vmem:[%s1 + $0x10] sm:$0xff]
      %v296 = vld [vmem:[%s1 + $0x18] sm:$0xff]
      %v297 = vld [vmem:[%s1 + $0x20] sm:$0xff]
      %v298 = vld [vmem:[%s1 + $0x28] sm:$0xff]
      %v299 = vld [vmem:[%s1 + $0x30] sm:$0xff]
      %v300 = vld [vmem:[%s1 + $0x38] sm:$0xff]
      %v301 = vld [vmem:[%s1 + $0x40] sm:$0xff]
      %v302 = vld [vmem:[%s1 + $0x48] sm:$0xff]
      %v303 = vld [vmem:[%s1 + $0x50] sm:$0xff]
      %v304 = vld [vmem:[%s1 + $0x58] sm:$0xff]
      %v305 = vld [vmem:[%s1 + $0x60] sm:$0xff]
      %v306 = vld [vmem:[%s1 + $0x68] sm:$0xff]
      %v307 = vld [vmem:[%s1 + $0x70] sm:$0xff]
      %v308 = vld [vmem:[%s1 + $0x78] sm:$0xff]
      %v309 = vpack.c.bf16 %v294, %v293
      %v310 = vpack.c.bf16 %v296, %v295
      %v311 = vpack.c.bf16 %v298, %v297
      %v312 = vpack.c.bf16 %v300, %v299
      %v313 = vpack.c.bf16 %v302, %v301
      %v314 = vpack.c.bf16 %v304, %v303
      %v315 = vpack.c.bf16 %v306, %v305
      %v316 = vpack.c.bf16 %v308, %v307
      %vm317 = vcmask 261120
      %v319 = vsel %vm317, %v289, 0
      %v322 = vsel %vm317, %v290, 0
      %v325 = vsel %vm317, %v291, 0
      %v328 = vsel %vm317, %v292, 0
      %v331 = vsel %vm317, %v309, 0
      %v334 = vsel %vm317, %v310, 0
      %v337 = vsel %vm317, %v311, 0
      %v340 = vsel %vm317, %v312, 0
      %v343 = vsel %vm317, %v313, 0
      %v346 = vsel %vm317, %v314, 0
      %v349 = vsel %vm317, %v315, 0
      %v352 = vsel %vm317, %v316, 0
      %354 = vmatprep.subr.bf16.mxu0 0
      %355 = vmatpush1.bf16.xpose.msra.mxu0 %v331
      %356 = vmatprep.subr.bf16.mxu0 0
      %357 = vmatpush1.bf16.xpose.msra.mxu0 %v334
      %358 = vmatprep.subr.bf16.mxu0 0
      %359 = vmatpush1.bf16.xpose.msra.mxu0 %v337
      %360 = vmatprep.subr.bf16.mxu0 0
      %361 = vmatpush1.bf16.xpose.msra.mxu0 %v340
      %362 = vmatprep.subr.bf16.mxu0 0
      %363 = vmatpush1.bf16.xpose.msra.mxu0 %v343
      %364 = vmatprep.subr.bf16.mxu0 0
      %365 = vmatpush1.bf16.xpose.msra.mxu0 %v346
      %366 = vmatprep.subr.bf16.mxu0 0
      %367 = vmatpush1.bf16.xpose.msra.mxu0 %v349
      %368 = vmatprep.subr.bf16.mxu0 0
      %369 = vmatpush1.bf16.xpose.msra.mxu0 %v352
      %370 = vmatprep.subr.bf16.mxu0 0
      %371 = vmatpush1.bf16.xpose.msra.mxu0 0
      %372 = vmatprep.subr.bf16.mxu0 0
      %373 = vmatpush1.bf16.xpose.msra.mxu0 0
      %374 = vmatprep.subr.bf16.mxu0 0
      %375 = vmatpush1.bf16.xpose.msra.mxu0 0
      %376 = vmatprep.subr.bf16.mxu0 0
      %377 = vmatpush1.bf16.xpose.msra.mxu0 0
      %378 = vmatprep.subr.bf16.mxu0 0
      %379 = vmatpush1.bf16.xpose.msra.mxu0 0
      %380 = vmatprep.subr.bf16.mxu0 0
      %381 = vmatpush1.bf16.xpose.msra.mxu0 0
      %382 = vmatprep.subr.bf16.mxu0 0
      %383 = vmatpush1.bf16.xpose.msra.mxu0 0
      %384 = vmatprep.subr.bf16.mxu0 0
      %385 = vmatpush1.bf16.xpose.msra.mxu0 0
      %386 = vmatprep.mubr.bf16.mxu0 0
      %387 = vmatmul.mubr.bf16.gmra.mrb[0].mxu0 %v319
      %v388 = vpop.f32.mrb[0].mxu0
      %v389 = vadd.f32 0.0, %v388
      %v390 = vpop.f32.mrb[0].mxu0
      %v391 = vpop.f32.mrb[0].mxu0
      %v392 = vadd.f32 0.0, %v391
      %v393 = vpop.f32.mrb[0].mxu0
      %394 = vmatprep.mubr.bf16.mxu0 0
      %395 = vmatmul.mubr.bf16.gmra.mrb[0].mxu0 %v322
      %v396 = vpop.f32.mrb[0].mxu0
      %v397 = vadd.f32 0.0, %v396
      %v398 = vpop.f32.mrb[0].mxu0
      %v399 = vpop.f32.mrb[0].mxu0
      %v400 = vadd.f32 0.0, %v399
      %v401 = vpop.f32.mrb[0].mxu0
      %402 = vmatprep.mubr.bf16.mxu0 0
      %403 = vmatmul.mubr.bf16.gmra.mrb[0].mxu0 %v325
      %v404 = vpop.f32.mrb[0].mxu0
      %v405 = vadd.f32 0.0, %v404
      %v406 = vpop.f32.mrb[0].mxu0
      %v407 = vpop.f32.mrb[0].mxu0
      %v408 = vadd.f32 0.0, %v407
      %v409 = vpop.f32.mrb[0].mxu0
      %410 = vmatprep.mubr.bf16.mxu0 0
      %411 = vmatmul.mubr.bf16.gmra.mrb[0].mxu0 %v328
      %v412 = vpop.f32.mrb[0].mxu0
      %v413 = vadd.f32 0.0, %v412
      %v414 = vpop.f32.mrb[0].mxu0
      %v415 = vpop.f32.mrb[0].mxu0
      %v416 = vadd.f32 0.0, %v415
      %v417 = vpop.f32.mrb[0].mxu0
      %418 = vdwg.mxu0
      %419 = vmax.xlane.f32.xlu0 %v389
      %v420 = vpop.xlane.xlu0 %419
      %421 = vmax.xlane.f32.xlu0 %v392
      %v422 = vpop.xlane.xlu0 %421
      %423 = vmax.xlane.f32.xlu0 %v397
      %v424 = vpop.xlane.xlu0 %423
      %425 = vmax.xlane.f32.xlu0 %v400
      %v426 = vpop.xlane.xlu0 %425
      %427 = vmax.xlane.f32.xlu0 %v405
      %v428 = vpop.xlane.xlu0 %427
      %429 = vmax.xlane.f32.xlu0 %v408
      %v430 = vpop.xlane.xlu0 %429
      %431 = vmax.xlane.f32.xlu0 %v413
      %v432 = vpop.xlane.xlu0 %431
      %433 = vmax.xlane.f32.xlu0 %v416
      %v434 = vpop.xlane.xlu0 %433
      %v435 = vsub.f32 %v389, %v420
      %v436 = vsub.f32 %v392, %v422
      %v437 = vsub.f32 %v397, %v424
      %v438 = vsub.f32 %v400, %v426
      %v439 = vsub.f32 %v405, %v428
      %v440 = vsub.f32 %v408, %v430
      %v441 = vsub.f32 %v413, %v432
      %v442 = vsub.f32 %v416, %v434
      %v443 = vld [vmem:[%s258] sm:$0xff]
      %v444 = vld [vmem:[%s258 + $0x8] sm:$0xff]
      %v445 = vld [vmem:[%s258 + $0x10] sm:$0xff]
      %v446 = vld [vmem:[%s258 + $0x18] sm:$0xff]
      %v447 = vld [vmem:[%s258 + $0x20] sm:$0xff]
      %v448 = vld [vmem:[%s258 + $0x28] sm:$0xff]
      %v449 = vld [vmem:[%s258 + $0x30] sm:$0xff]
      %v450 = vld [vmem:[%s258 + $0x38] sm:$0xff]
      %v451 = vld [vmem:[%s3] sm:$0x1]
      %453 = vset.pattern.permute.xlu0 0
      %454 = vperm.xlu0 %453, %v443
      %v455 = vpop.permute.xlu0 %454
      %458 = vset.pattern.permute.xlu0 0
      %459 = vperm.xlu0 %458, %v444
      %v460 = vpop.permute.xlu0 %459
      %463 = vset.pattern.permute.xlu0 0
      %464 = vperm.xlu0 %463, %v445
      %v465 = vpop.permute.xlu0 %464
      %468 = vset.pattern.permute.xlu0 0
      %469 = vperm.xlu0 %468, %v446
      %v470 = vpop.permute.xlu0 %469
      %473 = vset.pattern.permute.xlu0 0
      %474 = vperm.xlu0 %473, %v447
      %v475 = vpop.permute.xlu0 %474
      %478 = vset.pattern.permute.xlu0 0
      %479 = vperm.xlu0 %478, %v448
      %v480 = vpop.permute.xlu0 %479
      %483 = vset.pattern.permute.xlu0 0
      %484 = vperm.xlu0 %483, %v449
      %v485 = vpop.permute.xlu0 %484
      %488 = vset.pattern.permute.xlu0 0
      %489 = vperm.xlu0 %488, %v450
      %v490 = vpop.permute.xlu0 %489
      %v493 = vlaneseq
      %v494 = vshrl.u32 %v493, 7
      %v495 = vsub.s32 0, %v494
      %v496 = vrot.slane %v451, %v495
      %vm498 = vcmp.eq.f32.partialorder %v455, %v496
      %vm499 = vcmp.eq.f32.partialorder %v460, %v496
      %vm500 = vcmp.eq.f32.partialorder %v465, %v496
      %vm501 = vcmp.eq.f32.partialorder %v470, %v496
      %vm502 = vcmp.eq.f32.partialorder %v475, %v496
      %vm503 = vcmp.eq.f32.partialorder %v480, %v496
      %vm504 = vcmp.eq.f32.partialorder %v485, %v496
      %vm505 = vcmp.eq.f32.partialorder %v490, %v496
      %s506 = smul.u32 %s16, 64
      %v507 = vlaneseq
      %v508 = vshrl.u32 %v507, 7
      %v509 = vadd.s32 %v508, 8
      %v510 = vadd.s32 %v508, 16
      %v511 = vadd.s32 %v508, 24
      %v512 = vadd.s32 %v508, 32
      %v513 = vadd.s32 %v508, 40
      %v514 = vadd.s32 %v508, 48
      %v515 = vadd.s32 %v508, 56
      %v516 = vstv %s506
      %v517 = vadd.s32 %v508, %v516
      %v518 = vadd.s32 %v509, %v516
      %v519 = vadd.s32 %v510, %v516
      %v520 = vadd.s32 %v511, %v516
      %v521 = vadd.s32 %v512, %v516
      %v522 = vadd.s32 %v513, %v516
      %v523 = vadd.s32 %v514, %v516
      %v524 = vadd.s32 %v515, %v516
      %v525 = vlaneseq
      %v526 = vand.u32 %v525, 127
      %vm527 = vcmp.ne.s32.totalorder %v517, %v526
      %vm528 = vcmp.ne.s32.totalorder %v518, %v526
      %vm529 = vcmp.ne.s32.totalorder %v519, %v526
      %vm530 = vcmp.ne.s32.totalorder %v520, %v526
      %vm531 = vcmp.ne.s32.totalorder %v521, %v526
      %vm532 = vcmp.ne.s32.totalorder %v522, %v526
      %vm533 = vcmp.ne.s32.totalorder %v523, %v526
      %vm534 = vcmp.ne.s32.totalorder %v524, %v526
      %v535 = vmul.f32 %v435, 1.442695
      %v536 = vpow.pop %v535
      %v537 = vmul.f32 %v436, 1.442695
      %v538 = vpow.pop %v537
      %v539 = vmul.f32 %v437, 1.442695
      %v540 = vpow.pop %v539
      %v541 = vmul.f32 %v438, 1.442695
      %v542 = vpow.pop %v541
      %v543 = vmul.f32 %v439, 1.442695
      %v544 = vpow.pop %v543
      %v545 = vmul.f32 %v440, 1.442695
      %v546 = vpow.pop %v545
      %v547 = vmul.f32 %v441, 1.442695
      %v548 = vpow.pop %v547
      %v549 = vmul.f32 %v442, 1.442695
      %v550 = vpow.pop %v549
      %v551 = vsel %vm498, 0.0, %v536
      %v552 = vsel %vm499, 0.0, %v538
      %v553 = vsel %vm500, 0.0, %v540
      %v554 = vsel %vm501, 0.0, %v542
      %v555 = vsel %vm502, 0.0, %v544
      %v556 = vsel %vm503, 0.0, %v546
      %v557 = vsel %vm504, 0.0, %v548
      %v558 = vsel %vm505, 0.0, %v550
      %559 = vadd.xlane.f32.xlu0 %v551
      %v560 = vpop.xlane.xlu0 %559
      %561 = vadd.xlane.f32.xlu0 %v552
      %v562 = vpop.xlane.xlu0 %561
      %563 = vadd.xlane.f32.xlu0 %v553
      %v564 = vpop.xlane.xlu0 %563
      %565 = vadd.xlane.f32.xlu0 %v554
      %v566 = vpop.xlane.xlu0 %565
      %567 = vadd.xlane.f32.xlu0 %v555
      %v568 = vpop.xlane.xlu0 %567
      %569 = vadd.xlane.f32.xlu0 %v556
      %v570 = vpop.xlane.xlu0 %569
      %571 = vadd.xlane.f32.xlu0 %v557
      %v572 = vpop.xlane.xlu0 %571
      %573 = vadd.xlane.f32.xlu0 %v558
      %v574 = vpop.xlane.xlu0 %573
      %v575 = vadd.f32 %v536, %v560
      %v576 = vadd.f32 %v538, %v562
      %v577 = vadd.f32 %v540, %v564
      %v578 = vadd.f32 %v542, %v566
      %v579 = vadd.f32 %v544, %v568
      %v580 = vadd.f32 %v546, %v570
      %v581 = vadd.f32 %v548, %v572
      %v582 = vadd.f32 %v550, %v574
      %v583 = vlog2.pop %v575
      %v584 = vmul.f32 %v583, 0.6931472
      %v585 = vlog2.pop %v576
      %v586 = vmul.f32 %v585, 0.6931472
      %v587 = vlog2.pop %v577
      %v588 = vmul.f32 %v587, 0.6931472
      %v589 = vlog2.pop %v578
      %v590 = vmul.f32 %v589, 0.6931472
      %v591 = vlog2.pop %v579
      %v592 = vmul.f32 %v591, 0.6931472
      %v593 = vlog2.pop %v580
      %v594 = vmul.f32 %v593, 0.6931472
      %v595 = vlog2.pop %v581
      %v596 = vmul.f32 %v595, 0.6931472
      %v597 = vlog2.pop %v582
      %v598 = vmul.f32 %v597, 0.6931472
      %v599 = vsub.f32 %v435, %v584
      %v600 = vsub.f32 %v436, %v586
      %v601 = vsub.f32 %v437, %v588
      %v602 = vsub.f32 %v438, %v590
      %v603 = vsub.f32 %v439, %v592
      %v604 = vsub.f32 %v440, %v594
      %v605 = vsub.f32 %v441, %v596
      %v606 = vsub.f32 %v442, %v598
      %vm607 = vmand %vm498, %vm527
      %vm608 = vmand %vm499, %vm528
      %vm609 = vmand %vm500, %vm529
      %vm610 = vmand %vm501, %vm530
      %vm611 = vmand %vm502, %vm531
      %vm612 = vmand %vm503, %vm532
      %vm613 = vmand %vm504, %vm533
      %vm614 = vmand %vm505, %vm534
      %v615 = vsel %vm607, %v599, 0.0
      %v616 = vsel %vm608, %v600, 0.0
      %v617 = vsel %vm609, %v601, 0.0
      %v618 = vsel %vm610, %v602, 0.0
      %v619 = vsel %vm611, %v603, 0.0
      %v620 = vsel %vm612, %v604, 0.0
      %v621 = vsel %vm613, %v605, 0.0
      %v622 = vsel %vm614, %v606, 0.0
      %623 = vadd.xlane.f32.xlu0 %v615
      %v624 = vpop.xlane.xlu0 %623
      %625 = vadd.xlane.f32.xlu0 %v616
      %v626 = vpop.xlane.xlu0 %625
      %627 = vadd.xlane.f32.xlu0 %v617
      %v628 = vpop.xlane.xlu0 %627
      %629 = vadd.xlane.f32.xlu0 %v618
      %v630 = vpop.xlane.xlu0 %629
      %631 = vadd.xlane.f32.xlu0 %v619
      %v632 = vpop.xlane.xlu0 %631
      %633 = vadd.xlane.f32.xlu0 %v620
      %v634 = vpop.xlane.xlu0 %633
      %635 = vadd.xlane.f32.xlu0 %v621
      %v636 = vpop.xlane.xlu0 %635
      %637 = vadd.xlane.f32.xlu0 %v622
      %v638 = vpop.xlane.xlu0 %637
      %v639 = vld [vmem:[%s264] sm:$0xff]
      %v640 = vld [vmem:[%s264 + $0x8] sm:$0xff]
      %v641 = vld [vmem:[%s264 + $0x10] sm:$0xff]
      %v642 = vld [vmem:[%s264 + $0x18] sm:$0xff]
      %v643 = vld [vmem:[%s264 + $0x20] sm:$0xff]
      %v644 = vld [vmem:[%s264 + $0x28] sm:$0xff]
      %v645 = vld [vmem:[%s264 + $0x30] sm:$0xff]
      %v646 = vld [vmem:[%s264 + $0x38] sm:$0xff]
      %v647 = vrcp.pop %v639
      %v648 = vmul.f32 %v624, %v647
      %v649 = vrcp.pop %v640
      %v650 = vmul.f32 %v626, %v649
      %v651 = vrcp.pop %v641
      %v652 = vmul.f32 %v628, %v651
      %v653 = vrcp.pop %v642
      %v654 = vmul.f32 %v630, %v653
      %v655 = vrcp.pop %v643
      %v656 = vmul.f32 %v632, %v655
      %v657 = vrcp.pop %v644
      %v658 = vmul.f32 %v634, %v657
      %v659 = vrcp.pop %v645
      %v660 = vmul.f32 %v636, %v659
      %v661 = vrcp.pop %v646
      %v662 = vmul.f32 %v638, %v661
      %v663 = vmul.f32 %v648, -1.4285715
      %v664 = vmul.f32 %v650, -1.4285715
      %v665 = vmul.f32 %v652, -1.4285715
      %v666 = vmul.f32 %v654, -1.4285715
      %v667 = vmul.f32 %v656, -1.4285715
      %v668 = vmul.f32 %v658, -1.4285715
      %v669 = vmul.f32 %v660, -1.4285715
      %v670 = vmul.f32 %v662, -1.4285715
      %vm671 = vcmask 7168
      %672 = vst.msk [vmem:[%s270] sm:$0xff] %vm671, %v663
      %673 = vst.msk [vmem:[%s270 + $0x8] sm:$0xff] %vm671, %v664
      %674 = vst.msk [vmem:[%s270 + $0x10] sm:$0xff] %vm671, %v665
      %675 = vst.msk [vmem:[%s270 + $0x18] sm:$0xff] %vm671, %v666
      %676 = vst.msk [vmem:[%s270 + $0x20] sm:$0xff] %vm671, %v667
      %677 = vst.msk [vmem:[%s270 + $0x28] sm:$0xff] %vm671, %v668
      %678 = vst.msk [vmem:[%s270 + $0x30] sm:$0xff] %vm671, %v669
      %679 = vst.msk [vmem:[%s270 + $0x38] sm:$0xff] %vm671, %v670
      %s680 = smul.u32 8, %s16
      %p681 = scmp.lt.s32.totalorder %s680, 15
      %s682 = scalar_select %p681, %s680, 15
      %s683 = smul.addr %s682, 8
      %s684 = scalar_lea.vmem %s5, %s683
      // Predicated region
      $region41: #{tpu_custom_call.1} parent=39 // pred_check
        %p685 = pneg %p154
      $region42: #{tpu_custom_call.1} parent=39 // pred_check_branch
        %687 = sbr.rel (%p685) target = $region44
      $region43: #{tpu_custom_call.1} parent=39 // pred_region
        %s688 = smul.u32 8, %s16
      $region44: #{tpu_custom_call.1} parent=39 // pred_fallthru
        _
    $region40: #{tpu_custom_call.1} parent=5 // pred_fallthru
      _
    %p689 = scmp.le.s32.totalorder 2, %s11
    // Predicated region
    $region45: #{tpu_custom_call.1} parent=5 // pred_check
      %p690 = pneg %p689
    $region46: #{tpu_custom_call.1} parent=5 // pred_check_branch
      %692 = sbr.rel (%p690) target = $region48
    $region47: #{tpu_custom_call.1} parent=5 // pred_region
      %s693 = ssub.s32 %s11, 2
      // Predicated region
      $region49: #{tpu_custom_call.1} parent=47 // pred_check
        %p694 = pneg %p160
      $region50: #{tpu_custom_call.1} parent=47 // pred_check_branch
        %696 = sbr.rel (%p694) target = $region52
      $region51: #{tpu_custom_call.1} parent=47 // pred_region
        %s697 = smul.u32 8, %s17
        %p698 = scmp.lt.s32.totalorder %s697, 15
        %s699 = scalar_select %p698, %s697, 15
        %s700 = smul.addr %s699, 8
        %s701 = scalar_lea.vmem %s5, %s700
      $region52: #{tpu_custom_call.1} parent=47 // pred_fallthru
        _
    $region48: #{tpu_custom_call.1} parent=5 // pred_fallthru
      _
  $region6: #{tpu_custom_call.1} parent=0 // loop_footer
    %s15 = sadd.s32 1, %s11
  $region7: #{tpu_custom_call.1} parent=0 // loop_footer_branch
    %10 = sbr.rel target = $region3
  $region8: #{tpu_custom_call.1} parent=0 // loop_exit
    _

</llo_original>
